<compile_context>
chip_gen: v7x
topology: tpu7x:2x2x1
jax: 0.10.0
libtpu: 0.0.40
codegen_flags: <defaults>
</compile_context>

<pallas_src>
import jax
import jax.numpy as jnp
from jax.experimental import pallas as pl
from jax.experimental.pallas import tpu as pltpu

KNW_CLASS_NUM = 10
IN_FEATURES = 256
OUT_FEATURES = KNW_CLASS_NUM * 4          # 40
OUT_PADDED = 128                          # lane-dense output width (sliced back to 40)
TEMPERATURE = 0.05
INV_TEMPERATURE = 1.0 / TEMPERATURE       # 20.0
EPS = 1e-12                               # F.normalize default eps
MAX_TILE_ROWS = 1024                      # ~1 MiB f32 per x buffer -> fits all gens


def _round_up(n, m):
    return ((n + m - 1) // m) * m


def gn_kernel(x_ref, w_ref, o_ref):
    # x_ref: [TB, 256]   w_ref: [256, 128] (zero-padded past col 40)   o_ref: [TB, 128]
    x = x_ref[...].astype(jnp.float32)
    # F.normalize(p=2, dim=1): x / clamp_min(||x||, eps)  ==  x * rsqrt(max(||x||^2, eps^2))
    sq = jnp.sum(x * x, axis=-1, keepdims=True)
    scale = INV_TEMPERATURE * jax.lax.rsqrt(jnp.maximum(sq, EPS * EPS))
    x_n = x * scale                       # temperature folded into per-row scale
    o_ref[...] = jnp.dot(
        x_n, w_ref[...], preferred_element_type=jnp.float32
    ).astype(o_ref.dtype)


def gn_forward(x, w_t, reverse=False):
    """x: [B, 256] float32, w_t: [256, 40] float32 (W transposed).

    GradientReversalLayer is identity (* 1) in the forward pass; its backward
    behavior is a training-time autograd concern, not part of this forward kernel.
    """
    # TODO(synk): gradient-reversal backward semantics would need a custom_vjp; forward is identity.
    del reverse
    B = x.shape[0]

    # Batch tiling: TB rows per grid step (multiple of 8), pad B up to a multiple of TB.
    TB = min(MAX_TILE_ROWS, _round_up(B, 8))
    B_pad = _round_up(B, TB)
    if B_pad != B:
        x = jnp.pad(x, ((0, B_pad - B), (0, 0)))
    # Zero-pad weight columns 40 -> 128 so output tiles are lane-dense.
    w_pad = jnp.pad(w_t, ((0, 0), (0, OUT_PADDED - OUT_FEATURES)))

    grid = (B_pad // TB,)
    cost = pl.CostEstimate(
        flops=2 * B_pad * IN_FEATURES * OUT_PADDED,
        transcendentals=B_pad,
        bytes_accessed=(
            B_pad * IN_FEATURES * 4
            + IN_FEATURES * OUT_PADDED * 4
            + B_pad * OUT_PADDED * 4
        ),
    )

    out = pl.pallas_call(
        gn_kernel,
        out_shape=jax.ShapeDtypeStruct((B_pad, OUT_PADDED), jnp.float32),
        grid_spec=pltpu.PrefetchScalarGridSpec(
            num_scalar_prefetch=0,
            grid=grid,
            in_specs=[
                pl.BlockSpec((TB, IN_FEATURES), lambda i: (i, 0)),
                pl.BlockSpec((IN_FEATURES, OUT_PADDED), lambda i: (0, 0)),
            ],
            out_specs=pl.BlockSpec((TB, OUT_PADDED), lambda i: (i, 0)),
        ),
        compiler_params=pltpu.CompilerParams(
            dimension_semantics=("parallel",),
        ),
        cost_estimate=cost,
    )(x, w_pad)

    return out[:B, :OUT_FEATURES]


def init_params(key):
    # PyTorch nn.Linear default init: kaiming_uniform_(a=sqrt(5)) ->
    # U(-1/sqrt(fan_in), 1/sqrt(fan_in)) with weight shape (out, in).
    bound = 1.0 / jnp.sqrt(jnp.float32(IN_FEATURES))
    w = jax.random.uniform(
        key, (OUT_FEATURES, IN_FEATURES), jnp.float32, minval=-bound, maxval=bound
    )
    return w.T  # store transposed [256, 40] for the kernel


def _reference(x, w_t):
    norm = jnp.sqrt(jnp.sum(x * x, axis=-1, keepdims=True))
    x_n = x / jnp.maximum(norm, EPS)
    return (x_n @ w_t) / TEMPERATURE


if __name__ == "__main__":
    key = jax.random.PRNGKey(0)
    kx, kw, kx2 = jax.random.split(key, 3)
    w_t = init_params(kw)

    # Small check (single grid step).
    B = 8
    x = jax.random.normal(kx, (B, IN_FEATURES), jnp.float32)
    out = jax.block_until_ready(gn_forward(x, w_t))
    ref = _reference(x, w_t)
    assert out.shape == (B, OUT_FEATURES)
    assert jnp.allclose(out, ref, atol=1e-4, rtol=1e-4)

    # Larger check exercising the multi-step tiled grid + ragged-batch padding path.
    B2 = 2056
    x2 = jax.random.normal(kx2, (B2, IN_FEATURES), jnp.float32)
    out2 = jax.block_until_ready(gn_forward(x2, w_t))
    ref2 = _reference(x2, w_t)
    assert out2.shape == (B2, OUT_FEATURES)
    assert jnp.allclose(out2, ref2, atol=1e-4, rtol=1e-4)

    print("KERNEL_OK")
</pallas_src>

<mosaic_0001>
module attributes {stable_mosaic.version = 11 : i64} {
  func.func @gn_kernel(%arg0: i32, %arg1: memref<8x256xf32, #tpu.memory_space<vmem>>, %arg2: memref<256x128xf32, #tpu.memory_space<vmem>>, %arg3: memref<8x128xf32, #tpu.memory_space<vmem>>) attributes {dimension_semantics = [#tpu.dimension_semantics<parallel>], iteration_bounds = array<i64: 1>, scalar_prefetch = 0 : i64, scratch_operands = 0 : i64, tpu.core_type = #tpu.core_type<tc>, window_params = [{transform_indices = @transform_0, window_bounds = array<i64: 8, 256>}, {pipeline_mode = #tpu.pipeline_mode<synchronous>, transform_indices = @transform_1, window_bounds = array<i64: 256, 128>}, {transform_indices = @transform_2, window_bounds = array<i64: 8, 128>}]} {
    %c0 = arith.constant 0 : index
    %c0_0 = arith.constant 0 : index
    %0 = vector.load %arg1[%c0, %c0_0] : memref<8x256xf32, #tpu.memory_space<vmem>>, vector<8x256xf32>
    %1 = arith.mulf %0, %0 : vector<8x256xf32>
    %cst = arith.constant dense<0.000000e+00> : vector<8xf32>
    %2 = vector.multi_reduction <add>, %1, %cst [1] : vector<8x256xf32> to vector<8xf32>
    %3 = vector.shape_cast %2 : vector<8xf32> to vector<8x1xf32>
    %cst_1 = arith.constant 1.000000e-24 : f32
    %4 = vector.broadcast %cst_1 : f32 to vector<8x1xf32>
    %5 = arith.maximumf %3, %4 : vector<8x1xf32>
    %6 = math.rsqrt %5 : vector<8x1xf32>
    %cst_2 = arith.constant 2.000000e+01 : f32
    %7 = vector.broadcast %cst_2 : f32 to vector<8x1xf32>
    %8 = arith.mulf %7, %6 : vector<8x1xf32>
    %9 = vector.broadcast %8 : vector<8x1xf32> to vector<8x256xf32>
    %10 = arith.mulf %0, %9 : vector<8x256xf32>
    %c0_3 = arith.constant 0 : index
    %c0_4 = arith.constant 0 : index
    %11 = vector.load %arg2[%c0_3, %c0_4] : memref<256x128xf32, #tpu.memory_space<vmem>>, vector<256x128xf32>
    %cst_5 = arith.constant dense<0.000000e+00> : vector<8x128xf32>
    %12 = tpu.matmul %10, %11, %cst_5 {dimension_numbers = #tpu.dot_dimension_numbers<[1], [0], [0], [1], [0, 0, 1, 1], [], []>} : vector<8x256xf32>, vector<256x128xf32>, vector<8x128xf32> -> vector<8x128xf32>
    %c0_6 = arith.constant 0 : index
    %c0_7 = arith.constant 0 : index
    %13 = vector.load %arg3[%c0_6, %c0_7] : memref<8x128xf32, #tpu.memory_space<vmem>>, vector<8x128xf32>
    tpu.vector_store %arg3[%c0_6, %c0_7], %12 {strides = array<i32>} : memref<8x128xf32, #tpu.memory_space<vmem>>, vector<8x128xf32>,
    return
  }
  func.func @transform_0(%arg0: i32) -> (i32, i32) {
    %c0_i32 = arith.constant 0 : i32
    %c0_i32_0 = arith.constant 0 : i32
    return %arg0, %c0_i32 : i32, i32
  }
  func.func @transform_1(%arg0: i32) -> (i32, i32) {
    %c0_i32 = arith.constant 0 : i32
    %c0_i32_0 = arith.constant 0 : i32
    %c0_i32_1 = arith.constant 0 : i32
    return %c0_i32, %c0_i32_0 : i32, i32
  }
  func.func @transform_2(%arg0: i32) -> (i32, i32) {
    %c0_i32 = arith.constant 0 : i32
    %c0_i32_0 = arith.constant 0 : i32
    return %arg0, %c0_i32 : i32, i32
  }
}

</mosaic_0001>

<llo_original>
// kernel: tpu_custom_call.1
$region0: #{tpu_custom_call.1}
  #allocation0 [shape = 'u32[]', space=smem, size = 0x4, offset = 0x4, fixed_abs, tag = 'smem constant byte address 0x4 - core index']
  #allocation1 [shape = 'u32[144,128]{1,0:T(1,128)}', space=vmem, size = 0x12000, scoped, tag = 'internal scratch']
  %s0 = inlined_call_operand.hbm [shape: f32[8,256], index: 0, kind: input, shape index: {}]
  %s1 = inlined_call_operand.hbm [shape: f32[256,128], index: 1, kind: input, shape index: {}]
  %s2 = inlined_call_operand.hbm [shape: f32[8,128], index: 2, kind: output, shape index: {}]
  %s3 = sld [smem:[#allocation0]]
  $region26: #{tpu_custom_call.1} parent=0
    _
  %s5 = ssub.s32 1, %s3
  %s6 = scalar_select 0, %s5, %s3
  $region1: #{tpu_custom_call.1} parent=0
    #allocation2 [shape = 'u8[8192]{0}', space=vmem, size = 0x2000, scoped, tag = 'input window, operand 0, single buffered']
    #allocation3 [shape = 's32[1]{0}', space=sflag, size = 0x4, scoped, tag = 'scoped memory for tpu_custom_call.1']
    #allocation4 [shape = 's32[1]{0}', space=sflag, size = 0x4, scoped, tag = 'scoped memory for tpu_custom_call.1']
    #allocation5 [shape = 'u8[131072]{0}', space=vmem, size = 0x20000, scoped, tag = 'input window, operand 1, single buffered']
    #allocation6 [shape = 's32[1]{0}', space=sflag, size = 0x4, scoped, tag = 'scoped memory for tpu_custom_call.1']
    #allocation7 [shape = 'u8[4096]{0}', space=vmem, size = 0x1000, scoped, tag = 'output window, operand 0, single buffered']
    %7 = vsyncpa [#allocation3], 0
    %8 = vsyncpa [#allocation6], 0
    %9 = vsyncpa [#allocation4], 0
    // Predicated region
    $region2: #{tpu_custom_call.1} parent=1 // pred_check
      _
    $region3: #{tpu_custom_call.1} parent=1 // pred_check_branch
      %11 = sbr.rel (0) target = $region5
    $region4: #{tpu_custom_call.1} parent=1 // pred_region
      %s13 = ssub.s32 256, 256
      %14 = vsyncadd [#allocation3], %s13
      %s16 = sshll.u32 [#allocation2], 4
      %s17 = int_to_ptr.vmem [resolvable:$true] %s16
      %19 = dma.hbm_to_vmem [thread:$0]  %s0, 256, %s17, [#allocation3]
    $region5: #{tpu_custom_call.1} parent=1 // pred_fallthru
      _
    // Predicated region
    $region6: #{tpu_custom_call.1} parent=1 // pred_check
      _
    $region7: #{tpu_custom_call.1} parent=1 // pred_check_branch
      %21 = sbr.rel (0) target = $region9
    $region8: #{tpu_custom_call.1} parent=1 // pred_region
      %s23 = ssub.s32 4096, 4096
      %24 = vsyncadd [#allocation6], %s23
      %s25 = sshll.u32 [#allocation5], 4
      %s26 = int_to_ptr.vmem [resolvable:$true] %s25
      %31 = dma.hbm_to_vmem [thread:$0]  %s1, 4096, %s26, [#allocation6], 128, 128, 8
    $region9: #{tpu_custom_call.1} parent=1 // pred_fallthru
      _
    // Predicated region
    $region10: #{tpu_custom_call.1} parent=1 // pred_check
      _
    $region11: #{tpu_custom_call.1} parent=1 // pred_check_branch
      %33 = sbr.rel (0) target = $region13
    $region12: #{tpu_custom_call.1} parent=1 // pred_region
      %34 = dma.done [#allocation3], 256
    $region13: #{tpu_custom_call.1} parent=1 // pred_fallthru
      _
    // Predicated region
    $region14: #{tpu_custom_call.1} parent=1 // pred_check
      _
    $region15: #{tpu_custom_call.1} parent=1 // pred_check_branch
      %36 = sbr.rel (0) target = $region17
    $region16: #{tpu_custom_call.1} parent=1 // pred_region
      %37 = dma.done [#allocation6], 4096
    $region17: #{tpu_custom_call.1} parent=1 // pred_fallthru
      _
    %v38 = vld [vmem:[#allocation2] sm:$0xff]
    %v39 = vld [vmem:[#allocation2 + $0x8] sm:$0xff]
    %v40 = vmul.f32 %v38, %v38
    %v41 = vmul.f32 %v39, %v39
    %v42 = vadd.f32 %v40, %v41
    %43 = vadd.xlane.f32.xlu0 %v42
    %v44 = vpop.xlane.xlu0 %43
    %v45 = vmax.f32 %v44, 1e-24
    %v46 = vrsqrt.pop %v45
    %v47 = vmul.f32 %v46, 20.0
    %v48 = vmul.f32 %v38, %v47
    %v49 = vmul.f32 %v39, %v47
    %v50 = vld [vmem:[#allocation5] sm:$0xff]
    %v51 = vld [vmem:[#allocation5 + $0x8] sm:$0xff]
    %v52 = vld [vmem:[#allocation5 + $0x10] sm:$0xff]
    %v53 = vld [vmem:[#allocation5 + $0x18] sm:$0xff]
    %v54 = vld [vmem:[#allocation5 + $0x20] sm:$0xff]
    %v55 = vld [vmem:[#allocation5 + $0x28] sm:$0xff]
    %v56 = vld [vmem:[#allocation5 + $0x30] sm:$0xff]
    %v57 = vld [vmem:[#allocation5 + $0x38] sm:$0xff]
    %v58 = vld [vmem:[#allocation5 + $0x40] sm:$0xff]
    %v59 = vld [vmem:[#allocation5 + $0x48] sm:$0xff]
    %v60 = vld [vmem:[#allocation5 + $0x50] sm:$0xff]
    %v61 = vld [vmem:[#allocation5 + $0x58] sm:$0xff]
    %v62 = vld [vmem:[#allocation5 + $0x60] sm:$0xff]
    %v63 = vld [vmem:[#allocation5 + $0x68] sm:$0xff]
    %v64 = vld [vmem:[#allocation5 + $0x70] sm:$0xff]
    %v65 = vld [vmem:[#allocation5 + $0x78] sm:$0xff]
    %v66 = vld [vmem:[#allocation5 + $0x80] sm:$0xff]
    %v67 = vld [vmem:[#allocation5 + $0x88] sm:$0xff]
    %v68 = vld [vmem:[#allocation5 + $0x90] sm:$0xff]
    %v69 = vld [vmem:[#allocation5 + $0x98] sm:$0xff]
    %v70 = vld [vmem:[#allocation5 + $0xa0] sm:$0xff]
    %v71 = vld [vmem:[#allocation5 + $0xa8] sm:$0xff]
    %v72 = vld [vmem:[#allocation5 + $0xb0] sm:$0xff]
    %v73 = vld [vmem:[#allocation5 + $0xb8] sm:$0xff]
    %v74 = vld [vmem:[#allocation5 + $0xc0] sm:$0xff]
    %v75 = vld [vmem:[#allocation5 + $0xc8] sm:$0xff]
    %v76 = vld [vmem:[#allocation5 + $0xd0] sm:$0xff]
    %v77 = vld [vmem:[#allocation5 + $0xd8] sm:$0xff]
    %v78 = vld [vmem:[#allocation5 + $0xe0] sm:$0xff]
    %v79 = vld [vmem:[#allocation5 + $0xe8] sm:$0xff]
    %v80 = vld [vmem:[#allocation5 + $0xf0] sm:$0xff]
    %v81 = vld [vmem:[#allocation5 + $0xf8] sm:$0xff]
    %82 = vmatprep.subr.mxu0 0.0
    %83 = vmatpush1.msra.mxu0 %v50
    %84 = vmatprep.subr.mxu0 0.0
    %85 = vmatpush1.msra.mxu0 %v51
    %86 = vmatprep.subr.mxu0 0.0
    %87 = vmatpush1.msra.mxu0 %v52
    %88 = vmatprep.subr.mxu0 0.0
    %89 = vmatpush1.msra.mxu0 %v53
    %90 = vmatprep.subr.mxu0 0.0
    %91 = vmatpush1.msra.mxu0 %v54
    %92 = vmatprep.subr.mxu0 0.0
    %93 = vmatpush1.msra.mxu0 %v55
    %94 = vmatprep.subr.mxu0 0.0
    %95 = vmatpush1.msra.mxu0 %v56
    %96 = vmatprep.subr.mxu0 0.0
    %97 = vmatpush1.msra.mxu0 %v57
    %98 = vmatprep.subr.mxu0 0.0
    %99 = vmatpush1.msra.mxu0 %v58
    %100 = vmatprep.subr.mxu0 0.0
    %101 = vmatpush1.msra.mxu0 %v59
    %102 = vmatprep.subr.mxu0 0.0
    %103 = vmatpush1.msra.mxu0 %v60
    %104 = vmatprep.subr.mxu0 0.0
    %105 = vmatpush1.msra.mxu0 %v61
    %106 = vmatprep.subr.mxu0 0.0
    %107 = vmatpush1.msra.mxu0 %v62
    %108 = vmatprep.subr.mxu0 0.0
    %109 = vmatpush1.msra.mxu0 %v63
    %110 = vmatprep.subr.mxu0 0.0
    %111 = vmatpush1.msra.mxu0 %v64
    %112 = vmatprep.subr.mxu0 0.0
    %113 = vmatpush1.msra.mxu0 %v65
    %114 = vmatprep.subr.mxu0 0.0
    %115 = vmatpush1.msra.mxu0 %v66
    %116 = vmatprep.subr.mxu0 0.0
    %117 = vmatpush1.msra.mxu0 %v67
    %118 = vmatprep.subr.mxu0 0.0
    %119 = vmatpush1.msra.mxu0 %v68
    %120 = vmatprep.subr.mxu0 0.0
    %121 = vmatpush1.msra.mxu0 %v69
    %122 = vmatprep.subr.mxu0 0.0
    %123 = vmatpush1.msra.mxu0 %v70
    %124 = vmatprep.subr.mxu0 0.0
    %125 = vmatpush1.msra.mxu0 %v71
    %126 = vmatprep.subr.mxu0 0.0
    %127 = vmatpush1.msra.mxu0 %v72
    %128 = vmatprep.subr.mxu0 0.0
    %129 = vmatpush1.msra.mxu0 %v73
    %130 = vmatprep.subr.mxu0 0.0
    %131 = vmatpush1.msra.mxu0 %v74
    %132 = vmatprep.subr.mxu0 0.0
    %133 = vmatpush1.msra.mxu0 %v75
    %134 = vmatprep.subr.mxu0 0.0
    %135 = vmatpush1.msra.mxu0 %v76
    %136 = vmatprep.subr.mxu0 0.0
    %137 = vmatpush1.msra.mxu0 %v77
    %138 = vmatprep.subr.mxu0 0.0
    %139 = vmatpush1.msra.mxu0 %v78
    %140 = vmatprep.subr.mxu0 0.0
    %141 = vmatpush1.msra.mxu0 %v79
    %142 = vmatprep.subr.mxu0 0.0
    %143 = vmatpush1.msra.mxu0 %v80
    %144 = vmatprep.subr.mxu0 0.0
    %145 = vmatpush1.msra.mxu0 %v81
    %146 = vmatprep.mubr.f32.mxu0 %v49
    %147 = vmatmul.mubr.f32.gmra.mrb[0].mxu0 %v48
    %v148 = vpop.f32.mrb[0].mxu0
    %v149 = vadd.f32 0.0, %v148
    %v150 = vpop.f32.mrb[0].mxu0
    %151 = vdwg.mxu0
    %152 = vst [vmem:[#allocation7] sm:$0xff] %v149
    // Predicated region
    $region18: #{tpu_custom_call.1} parent=1 // pred_check
      _
    $region19: #{tpu_custom_call.1} parent=1 // pred_check_branch
      %154 = sbr.rel (0) target = $region21
    $region20: #{tpu_custom_call.1} parent=1 // pred_region
      %s156 = ssub.s32 128, 128
      %157 = vsyncadd [#allocation4], %s156
      %s159 = sshll.u32 [#allocation7], 4
      %s160 = int_to_ptr.vmem [resolvable:$true] %s159
      %162 = dma.vmem_to_hbm [thread:$0]  %s160, 128, %s2, [#allocation4]
    $region21: #{tpu_custom_call.1} parent=1 // pred_fallthru
      _
    // Predicated region
    $region22: #{tpu_custom_call.1} parent=1 // pred_check
      _
    $region23: #{tpu_custom_call.1} parent=1 // pred_check_branch
      %164 = sbr.rel (0) target = $region25
    $region24: #{tpu_custom_call.1} parent=1 // pred_region
      %165 = dma.done [#allocation4], 128
    $region25: #{tpu_custom_call.1} parent=1 // pred_fallthru
      _
    %166 = vsyncpa [#allocation3], 1
    %167 = vsyncpa [#allocation6], 1
    %168 = vsyncpa [#allocation4], 1

</llo_original>
